<compile_context>
chip_gen: v7x
topology: tpu7x:2x2x1
jax: 0.10.0
libtpu: 0.0.40
codegen_flags: <defaults>
</compile_context>

<pallas_src>
import functools

import jax
import jax.numpy as jnp
from jax.experimental import pallas as pl
from jax.experimental.pallas import tpu as pltpu

EPS = 1e-5          # torch.nn.InstanceNorm3d default
NEG_SLOPE = 0.01    # torch.nn.LeakyReLU default


def _round_up(x, m):
    return (x + m - 1) // m * m


def _conv_stats_kernel(p_ref, w_ref, y_ref, s1_ref, s2_ref, acc_ref):
    """Grid = (N, S_tiles, K_tiles), K innermost.

    p_ref:  (1, tK, tS)   im2col patch tile (K on sublanes, S on lanes)
    w_ref:  (Cp, tK)      conv weight tile
    y_ref:  (1, Cp, tS)   conv output tile (f32), lane-dense along S
    s1_ref: (1, Cp, 1)    per-(sample, channel) running sum   (resident)
    s2_ref: (1, Cp, 1)    per-(sample, channel) running sumsq (resident)
    acc_ref:(Cp, tS) f32  K-accumulator scratch
    """
    s = pl.program_id(1)
    k = pl.program_id(2)
    nk = pl.num_programs(2)

    @pl.when(jnp.logical_and(s == 0, k == 0))
    def _():
        s1_ref[...] = jnp.zeros_like(s1_ref)
        s2_ref[...] = jnp.zeros_like(s2_ref)

    @pl.when(k == 0)
    def _():
        acc_ref[...] = jnp.zeros_like(acc_ref)

    # Conv3d as a matmul on the MXU: (Cp, tK) @ (tK, tS) -> (Cp, tS), f32 acc.
    acc_ref[...] += jnp.dot(w_ref[...], p_ref[0],
                            preferred_element_type=jnp.float32)

    @pl.when(k == nk - 1)
    def _():
        y = acc_ref[...]
        y_ref[0] = y.astype(y_ref.dtype)
        # One-pass statistics: accumulate sum and sum-of-squares over S (lanes).
        s1_ref[0] += jnp.sum(y, axis=-1, keepdims=True)
        s2_ref[0] += jnp.sum(y * y, axis=-1, keepdims=True)


def _norm_act_kernel(y_ref, s1_ref, s2_ref, g_ref, b_ref, o_ref, *, inv_spatial):
    """Grid = (N, S_tiles).  Normalize + affine + LeakyReLU on a lane-dense tile.

    y_ref:  (1, Cp, tS) f32 conv output
    s1_ref: (1, Cp, 1)      per-channel sum     over the full (unpadded) S
    s2_ref: (1, Cp, 1)      per-channel sum-sq  over the full (unpadded) S
    g_ref:  (Cp, 1)         InstanceNorm gamma
    b_ref:  (Cp, 1)         InstanceNorm beta
    o_ref:  (1, Cp, tS)
    """
    y = y_ref[0]                                              # (Cp, tS) f32
    mean = s1_ref[0] * inv_spatial                            # (Cp, 1)
    var = jnp.maximum(s2_ref[0] * inv_spatial - mean * mean, 0.0)
    scale = g_ref[...] * jax.lax.rsqrt(var + EPS)             # (Cp, 1)
    shift = b_ref[...] - mean * scale                         # (Cp, 1)
    z = y * scale + shift                                     # fused affine
    z = jnp.where(z >= 0, z, NEG_SLOPE * z)                   # LeakyReLU
    o_ref[0] = z.astype(o_ref.dtype)


def _im2col_3d(x, kernel, stride, padding, dilation):
    """x: (N, Cin, D, H, W) -> patches (N, Cin*k^3, S) (no transpose), plus dims."""
    N, C, D, H, W = x.shape
    k = kernel
    xp = jnp.pad(
        x, ((0, 0), (0, 0), (padding,) * 2, (padding,) * 2, (padding,) * 2)
    )
    Dp, Hp, Wp = xp.shape[2], xp.shape[3], xp.shape[4]
    Do = (Dp - dilation * (k - 1) - 1) // stride + 1
    Ho = (Hp - dilation * (k - 1) - 1) // stride + 1
    Wo = (Wp - dilation * (k - 1) - 1) // stride + 1

    slices = []
    for kd in range(k):
        for kh in range(k):
            for kw in range(k):
                sl = xp[
                    :, :,
                    kd * dilation: kd * dilation + stride * Do: stride,
                    kh * dilation: kh * dilation + stride * Ho: stride,
                    kw * dilation: kw * dilation + stride * Wo: stride,
                ]
                slices.append(sl)
    # (N, C, k^3, Do, Ho, Wo) with channel-major patch ordering (Cin, kd, kh, kw),
    # matching PyTorch's weight.reshape(Cout, Cin*k^3).
    patches = jnp.stack(slices, axis=2)
    patches = patches.reshape(N, C * k * k * k, Do * Ho * Wo)   # (N, K, S)
    return patches, (Do, Ho, Wo)


@functools.partial(jax.jit, static_argnames=("kernel", "stride", "padding", "dilation"))
def conv_layer_forward(x, weight, bias, gamma, beta, *, kernel, stride, padding, dilation):
    """Equivalent of _ConvLayer.forward for groups=1.

    x:      (N, Cin, D, H, W)
    weight: (Cout, Cin, k, k, k)
    bias:   (Cout,)   accepted for API parity; mathematically a no-op because
                      InstanceNorm removes any per-channel constant shift.
    gamma:  (Cout,)   InstanceNorm3d affine weight
    beta:   (Cout,)   InstanceNorm3d affine bias
    returns (N, Cout, Do, Ho, Wo) in x.dtype
    """
    del bias  # cancels exactly inside InstanceNorm
    N, Cin, D, H, W = x.shape
    Cout = weight.shape[0]

    patches, (Do, Ho, Wo) = _im2col_3d(x, kernel, stride, padding, dilation)
    S = Do * Ho * Wo
    K = Cin * kernel ** 3

    # ---- tiling / padding ------------------------------------------------
    Cp = _round_up(Cout, 8)                 # channels live on sublanes
    Kp = _round_up(K, 128)
    if Kp <= 1024:
        tK = Kp
    else:
        tK = 512
        Kp = _round_up(K, 512)
    Sp = _round_up(S, 128)
    if Sp <= 512:
        tS = Sp
    else:
        tS = 512
        Sp = _round_up(S, 512)
    n_s = Sp // tS
    n_k = Kp // tK

    patches = jnp.pad(patches, ((0, 0), (0, Kp - K), (0, Sp - S)))
    w_mat = jnp.pad(weight.reshape(Cout, K), ((0, Cp - Cout), (0, Kp - K)))
    g_col = jnp.pad(gamma, (0, Cp - Cout)).reshape(Cp, 1).astype(jnp.float32)
    b_col = jnp.pad(beta, (0, Cp - Cout)).reshape(Cp, 1).astype(jnp.float32)

    itemsize = patches.dtype.itemsize
    conv_cost = pl.CostEstimate(
        flops=2 * N * Sp * Kp * Cp,
        transcendentals=0,
        bytes_accessed=(N * Kp * Sp * itemsize + Cp * Kp * itemsize
                        + N * Cp * Sp * 4 + 2 * N * Cp * 4),
    )

    # ---- pass 1: conv matmul + per-channel sum / sumsq --------------------
    y, s1, s2 = pl.pallas_call(
        _conv_stats_kernel,
        out_shape=(
            jax.ShapeDtypeStruct((N, Cp, Sp), jnp.float32),
            jax.ShapeDtypeStruct((N, Cp, 1), jnp.float32),
            jax.ShapeDtypeStruct((N, Cp, 1), jnp.float32),
        ),
        grid_spec=pltpu.PrefetchScalarGridSpec(
            num_scalar_prefetch=0,
            grid=(N, n_s, n_k),
            in_specs=[
                pl.BlockSpec((1, tK, tS), lambda n, s, k: (n, k, s)),
                pl.BlockSpec((Cp, tK), lambda n, s, k: (0, k)),
            ],
            out_specs=(
                pl.BlockSpec((1, Cp, tS), lambda n, s, k: (n, 0, s)),
                pl.BlockSpec((1, Cp, 1), lambda n, s, k: (n, 0, 0)),
                pl.BlockSpec((1, Cp, 1), lambda n, s, k: (n, 0, 0)),
            ),
            scratch_shapes=[pltpu.VMEM((Cp, tS), jnp.float32)],
        ),
        compiler_params=pltpu.CompilerParams(
            dimension_semantics=("parallel", "arbitrary", "arbitrary"),
            vmem_limit_bytes=48 * 1024 * 1024,
        ),
        cost_estimate=conv_cost,
    )(patches, w_mat)

    # ---- pass 2: instance-norm affine + LeakyReLU --------------------------
    norm_kernel = functools.partial(_norm_act_kernel, inv_spatial=1.0 / S)
    out = pl.pallas_call(
        norm_kernel,
        out_shape=jax.ShapeDtypeStruct((N, Cp, Sp), x.dtype),
        grid_spec=pltpu.PrefetchScalarGridSpec(
            num_scalar_prefetch=0,
            grid=(N, n_s),
            in_specs=[
                pl.BlockSpec((1, Cp, tS), lambda n, s: (n, 0, s)),
                pl.BlockSpec((1, Cp, 1), lambda n, s: (n, 0, 0)),
                pl.BlockSpec((1, Cp, 1), lambda n, s: (n, 0, 0)),
                pl.BlockSpec((Cp, 1), lambda n, s: (0, 0)),
                pl.BlockSpec((Cp, 1), lambda n, s: (0, 0)),
            ],
            out_specs=pl.BlockSpec((1, Cp, tS), lambda n, s: (n, 0, s)),
        ),
        compiler_params=pltpu.CompilerParams(
            dimension_semantics=("parallel", "parallel"),
            vmem_limit_bytes=48 * 1024 * 1024,
        ),
    )(y, s1, s2, g_col, b_col)

    # (N, Cp, Sp) -> (N, Cout, Do, Ho, Wo): plain slice + reshape, no transpose.
    out = out[:, :Cout, :S].reshape(N, Cout, Do, Ho, Wo)
    return out


def _reference_forward(x, weight, bias, gamma, beta, *, kernel, stride, padding, dilation):
    """Pure-JAX reference (same semantics as the PyTorch module, bias included)."""
    y = jax.lax.conv_general_dilated(
        x, weight,
        window_strides=(stride,) * 3,
        padding=[(padding, padding)] * 3,
        rhs_dilation=(dilation,) * 3,
        dimension_numbers=("NCDHW", "OIDHW", "NCDHW"),
    ) + bias.reshape(1, -1, 1, 1, 1)
    mean = jnp.mean(y, axis=(2, 3, 4), keepdims=True)
    var = jnp.mean((y - mean) ** 2, axis=(2, 3, 4), keepdims=True)
    yn = (y - mean) / jnp.sqrt(var + EPS)
    z = yn * gamma.reshape(1, -1, 1, 1, 1) + beta.reshape(1, -1, 1, 1, 1)
    return jnp.where(z >= 0, z, NEG_SLOPE * z)


if __name__ == "__main__":
    # Small shapes consistent with _ConvLayer(Conv3d): NCDHW input.
    N, Cin, Cout = 2, 4, 8
    D = H = W = 8
    kernel, stride, padding, dilation = 3, 1, 1, 1  # groups=1, bias=True

    key = jax.random.PRNGKey(0)
    kx, kw, kb, kg, kbt = jax.random.split(key, 5)

    x = jax.random.normal(kx, (N, Cin, D, H, W), dtype=jnp.float32)
    fan_in = Cin * kernel ** 3
    weight = jax.random.normal(kw, (Cout, Cin, kernel, kernel, kernel),
                               dtype=jnp.float32) * (1.0 / fan_in) ** 0.5
    bias = jax.random.normal(kb, (Cout,), dtype=jnp.float32) * 0.1
    gamma = 1.0 + 0.1 * jax.random.normal(kg, (Cout,), dtype=jnp.float32)
    beta = 0.1 * jax.random.normal(kbt, (Cout,), dtype=jnp.float32)

    out = conv_layer_forward(
        x, weight, bias, gamma, beta,
        kernel=kernel, stride=stride, padding=padding, dilation=dilation,
    )
    out = jax.block_until_ready(out)

    ref = _reference_forward(
        x, weight, bias, gamma, beta,
        kernel=kernel, stride=stride, padding=padding, dilation=dilation,
    )
    assert out.shape == (N, Cout, D, H, W)
    assert jnp.allclose(out, ref, atol=1e-4, rtol=1e-4), "mismatch vs reference"

    print("KERNEL_OK")
</pallas_src>

<mosaic_0001>
module attributes {stable_mosaic.version = 11 : i64} {
  func.func @_conv_stats_kernel(%arg0: i32, %arg1: i32, %arg2: i32, %arg3: memref<1x128x512xf32, #tpu.memory_space<vmem>>, %arg4: memref<8x128xf32, #tpu.memory_space<vmem>>, %arg5: memref<1x8x512xf32, #tpu.memory_space<vmem>>, %arg6: memref<1x8x1xf32, #tpu.memory_space<vmem>>, %arg7: memref<1x8x1xf32, #tpu.memory_space<vmem>>, %arg8: memref<8x512xf32, #tpu.memory_space<vmem>>) attributes {dimension_semantics = [#tpu.dimension_semantics<parallel>, #tpu.dimension_semantics<arbitrary>, #tpu.dimension_semantics<arbitrary>], iteration_bounds = array<i64: 2, 1, 1>, scalar_prefetch = 0 : i64, scratch_operands = 1 : i64, tpu.core_type = #tpu.core_type<tc>, window_params = [{transform_indices = @transform_0, window_bounds = array<i64: 1, 128, 512>}, {transform_indices = @transform_1, window_bounds = array<i64: 8, 128>}, {transform_indices = @transform_2, window_bounds = array<i64: 1, 8, 512>}, {transform_indices = @transform_3, window_bounds = array<i64: 1, 8, 1>}, {transform_indices = @transform_4, window_bounds = array<i64: 1, 8, 1>}]} {
    %c0_i32 = arith.constant 0 : i32
    %0 = arith.cmpi eq, %arg1, %c0_i32 : i32
    %c0_i32_0 = arith.constant 0 : i32
    %1 = arith.cmpi eq, %arg2, %c0_i32_0 : i32
    %2 = arith.andi %0, %1 : i1
    %3 = arith.extui %2 : i1 to i32
    %c0_i32_1 = arith.constant 0 : i32
    %4 = arith.cmpi ne, %3, %c0_i32_1 : i32
    scf.if %4 {
      %cst_14 = arith.constant 0.000000e+00 : f32
      %18 = vector.broadcast %cst_14 : f32 to vector<1x8x1xf32>
      %c0_15 = arith.constant 0 : index
      %c0_16 = arith.constant 0 : index
      %c0_17 = arith.constant 0 : index
      %19 = vector.load %arg6[%c0_15, %c0_16, %c0_17] : memref<1x8x1xf32, #tpu.memory_space<vmem>>, vector<1x8x1xf32>
      tpu.vector_store %arg6[%c0_15, %c0_16, %c0_17], %18 {strides = array<i32>} : memref<1x8x1xf32, #tpu.memory_space<vmem>>, vector<1x8x1xf32>,
      %cst_18 = arith.constant 0.000000e+00 : f32
      %20 = vector.broadcast %cst_18 : f32 to vector<1x8x1xf32>
      %c0_19 = arith.constant 0 : index
      %c0_20 = arith.constant 0 : index
      %c0_21 = arith.constant 0 : index
      %21 = vector.load %arg7[%c0_19, %c0_20, %c0_21] : memref<1x8x1xf32, #tpu.memory_space<vmem>>, vector<1x8x1xf32>
      tpu.vector_store %arg7[%c0_19, %c0_20, %c0_21], %20 {strides = array<i32>} : memref<1x8x1xf32, #tpu.memory_space<vmem>>, vector<1x8x1xf32>,
    } else {
    }
    %c0_i32_2 = arith.constant 0 : i32
    %5 = arith.cmpi eq, %arg2, %c0_i32_2 : i32
    %6 = arith.extui %5 : i1 to i32
    %c0_i32_3 = arith.constant 0 : i32
    %7 = arith.cmpi ne, %6, %c0_i32_3 : i32
    scf.if %7 {
      %cst_14 = arith.constant 0.000000e+00 : f32
      %18 = vector.broadcast %cst_14 : f32 to vector<8x512xf32>
      %c0_15 = arith.constant 0 : index
      %c0_16 = arith.constant 0 : index
      %19 = vector.load %arg8[%c0_15, %c0_16] : memref<8x512xf32, #tpu.memory_space<vmem>>, vector<8x512xf32>
      tpu.vector_store %arg8[%c0_15, %c0_16], %18 {strides = array<i32>} : memref<8x512xf32, #tpu.memory_space<vmem>>, vector<8x512xf32>,
    } else {
    }
    %c0 = arith.constant 0 : index
    %c0_4 = arith.constant 0 : index
    %8 = vector.load %arg8[%c0, %c0_4] : memref<8x512xf32, #tpu.memory_space<vmem>>, vector<8x512xf32>
    %c0_5 = arith.constant 0 : index
    %c0_6 = arith.constant 0 : index
    %9 = vector.load %arg4[%c0_5, %c0_6] : memref<8x128xf32, #tpu.memory_space<vmem>>, vector<8x128xf32>
    %c0_7 = arith.constant 0 : index
    %c0_8 = arith.constant 0 : index
    %c0_9 = arith.constant 0 : index
    %10 = vector.load %arg3[%c0_7, %c0_8, %c0_9] : memref<1x128x512xf32, #tpu.memory_space<vmem>>, vector<1x128x512xf32>
    %11 = vector.shape_cast %10 : vector<1x128x512xf32> to vector<128x512xf32>
    %cst = arith.constant dense<0.000000e+00> : vector<8x512xf32>
    %12 = tpu.matmul %9, %11, %cst {dimension_numbers = #tpu.dot_dimension_numbers<[1], [0], [0], [1], [0, 0, 1, 1], [], []>} : vector<8x128xf32>, vector<128x512xf32>, vector<8x512xf32> -> vector<8x512xf32>
    %13 = arith.addf %8, %12 : vector<8x512xf32>
    %c0_10 = arith.constant 0 : index
    %c0_11 = arith.constant 0 : index
    %14 = vector.load %arg8[%c0_10, %c0_11] : memref<8x512xf32, #tpu.memory_space<vmem>>, vector<8x512xf32>
    tpu.vector_store %arg8[%c0_10, %c0_11], %13 {strides = array<i32>} : memref<8x512xf32, #tpu.memory_space<vmem>>, vector<8x512xf32>,
    %c0_i32_12 = arith.constant 0 : i32
    %15 = arith.cmpi eq, %arg2, %c0_i32_12 : i32
    %16 = arith.extui %15 : i1 to i32
    %c0_i32_13 = arith.constant 0 : i32
    %17 = arith.cmpi ne, %16, %c0_i32_13 : i32
    scf.if %17 {
      %c0_14 = arith.constant 0 : index
      %c0_15 = arith.constant 0 : index
      %18 = vector.load %arg8[%c0_14, %c0_15] : memref<8x512xf32, #tpu.memory_space<vmem>>, vector<8x512xf32>
      %c0_16 = arith.constant 0 : index
      %c0_17 = arith.constant 0 : index
      %c0_18 = arith.constant 0 : index
      %19 = vector.load %arg5[%c0_16, %c0_17, %c0_18] : memref<1x8x512xf32, #tpu.memory_space<vmem>>, vector<1x8x512xf32>
      %20 = vector.shape_cast %19 : vector<1x8x512xf32> to vector<8x512xf32>
      %21 = vector.shape_cast %18 : vector<8x512xf32> to vector<1x8x512xf32>
      tpu.vector_store %arg5[%c0_16, %c0_17, %c0_18], %21 {strides = array<i32>} : memref<1x8x512xf32, #tpu.memory_space<vmem>>, vector<1x8x512xf32>,
      %c0_19 = arith.constant 0 : index
      %c0_20 = arith.constant 0 : index
      %c0_21 = arith.constant 0 : index
      %22 = vector.load %arg6[%c0_19, %c0_20, %c0_21] : memref<1x8x1xf32, #tpu.memory_space<vmem>>, vector<1x8x1xf32>
      %23 = vector.shape_cast %22 : vector<1x8x1xf32> to vector<8x1xf32>
      %cst_22 = arith.constant dense<0.000000e+00> : vector<8xf32>
      %24 = vector.multi_reduction <add>, %18, %cst_22 [1] : vector<8x512xf32> to vector<8xf32>
      %25 = vector.shape_cast %24 : vector<8xf32> to vector<8x1xf32>
      %26 = arith.addf %23, %25 : vector<8x1xf32>
      %c0_23 = arith.constant 0 : index
      %c0_24 = arith.constant 0 : index
      %c0_25 = arith.constant 0 : index
      %27 = vector.load %arg6[%c0_23, %c0_24, %c0_25] : memref<1x8x1xf32, #tpu.memory_space<vmem>>, vector<1x8x1xf32>
      %28 = vector.shape_cast %27 : vector<1x8x1xf32> to vector<8x1xf32>
      %29 = vector.shape_cast %26 : vector<8x1xf32> to vector<1x8x1xf32>
      tpu.vector_store %arg6[%c0_23, %c0_24, %c0_25], %29 {strides = array<i32>} : memref<1x8x1xf32, #tpu.memory_space<vmem>>, vector<1x8x1xf32>,
      %c0_26 = arith.constant 0 : index
      %c0_27 = arith.constant 0 : index
      %c0_28 = arith.constant 0 : index
      %30 = vector.load %arg7[%c0_26, %c0_27, %c0_28] : memref<1x8x1xf32, #tpu.memory_space<vmem>>, vector<1x8x1xf32>
      %31 = vector.shape_cast %30 : vector<1x8x1xf32> to vector<8x1xf32>
      %32 = arith.mulf %18, %18 : vector<8x512xf32>
      %cst_29 = arith.constant dense<0.000000e+00> : vector<8xf32>
      %33 = vector.multi_reduction <add>, %32, %cst_29 [1] : vector<8x512xf32> to vector<8xf32>
      %34 = vector.shape_cast %33 : vector<8xf32> to vector<8x1xf32>
      %35 = arith.addf %31, %34 : vector<8x1xf32>
      %c0_30 = arith.constant 0 : index
      %c0_31 = arith.constant 0 : index
      %c0_32 = arith.constant 0 : index
      %36 = vector.load %arg7[%c0_30, %c0_31, %c0_32] : memref<1x8x1xf32, #tpu.memory_space<vmem>>, vector<1x8x1xf32>
      %37 = vector.shape_cast %36 : vector<1x8x1xf32> to vector<8x1xf32>
      %38 = vector.shape_cast %35 : vector<8x1xf32> to vector<1x8x1xf32>
      tpu.vector_store %arg7[%c0_30, %c0_31, %c0_32], %38 {strides = array<i32>} : memref<1x8x1xf32, #tpu.memory_space<vmem>>, vector<1x8x1xf32>,
    } else {
    }
    return
  }
  func.func @transform_0(%arg0: i32, %arg1: i32, %arg2: i32) -> (i32, i32, i32) {
    %c0_i32 = arith.constant 0 : i32
    return %arg0, %arg2, %arg1 : i32, i32, i32
  }
  func.func @transform_1(%arg0: i32, %arg1: i32, %arg2: i32) -> (i32, i32) {
    %c0_i32 = arith.constant 0 : i32
    %c0_i32_0 = arith.constant 0 : i32
    return %c0_i32, %arg2 : i32, i32
  }
  func.func @transform_2(%arg0: i32, %arg1: i32, %arg2: i32) -> (i32, i32, i32) {
    %c0_i32 = arith.constant 0 : i32
    %c0_i32_0 = arith.constant 0 : i32
    return %arg0, %c0_i32, %arg1 : i32, i32, i32
  }
  func.func @transform_3(%arg0: i32, %arg1: i32, %arg2: i32) -> (i32, i32, i32) {
    %c0_i32 = arith.constant 0 : i32
    %c0_i32_0 = arith.constant 0 : i32
    %c0_i32_1 = arith.constant 0 : i32
    return %arg0, %c0_i32, %c0_i32_0 : i32, i32, i32
  }
  func.func @transform_4(%arg0: i32, %arg1: i32, %arg2: i32) -> (i32, i32, i32) {
    %c0_i32 = arith.constant 0 : i32
    %c0_i32_0 = arith.constant 0 : i32
    %c0_i32_1 = arith.constant 0 : i32
    return %arg0, %c0_i32, %c0_i32_0 : i32, i32, i32
  }
}

module attributes {stable_mosaic.version = 11 : i64} {
  func.func @_norm_act_kernel(%arg0: i32, %arg1: i32, %arg2: memref<1x8x512xf32, #tpu.memory_space<vmem>>, %arg3: memref<1x8x1xf32, #tpu.memory_space<vmem>>, %arg4: memref<1x8x1xf32, #tpu.memory_space<vmem>>, %arg5: memref<8x1xf32, #tpu.memory_space<vmem>>, %arg6: memref<8x1xf32, #tpu.memory_space<vmem>>, %arg7: memref<1x8x512xf32, #tpu.memory_space<vmem>>) attributes {dimension_semantics = [#tpu.dimension_semantics<parallel>, #tpu.dimension_semantics<parallel>], iteration_bounds = array<i64: 2, 1>, scalar_prefetch = 0 : i64, scratch_operands = 0 : i64, tpu.core_type = #tpu.core_type<tc>, window_params = [{transform_indices = @transform_0, window_bounds = array<i64: 1, 8, 512>}, {transform_indices = @transform_1, window_bounds = array<i64: 1, 8, 1>}, {transform_indices = @transform_2, window_bounds = array<i64: 1, 8, 1>}, {pipeline_mode = #tpu.pipeline_mode<synchronous>, transform_indices = @transform_3, window_bounds = array<i64: 8, 1>}, {pipeline_mode = #tpu.pipeline_mode<synchronous>, transform_indices = @transform_4, window_bounds = array<i64: 8, 1>}, {transform_indices = @transform_5, window_bounds = array<i64: 1, 8, 512>}]} {
    %c0 = arith.constant 0 : index
    %c0_0 = arith.constant 0 : index
    %c0_1 = arith.constant 0 : index
    %0 = vector.load %arg2[%c0, %c0_0, %c0_1] : memref<1x8x512xf32, #tpu.memory_space<vmem>>, vector<1x8x512xf32>
    %1 = vector.shape_cast %0 : vector<1x8x512xf32> to vector<8x512xf32>
    %c0_2 = arith.constant 0 : index
    %c0_3 = arith.constant 0 : index
    %c0_4 = arith.constant 0 : index
    %2 = vector.load %arg3[%c0_2, %c0_3, %c0_4] : memref<1x8x1xf32, #tpu.memory_space<vmem>>, vector<1x8x1xf32>
    %3 = vector.shape_cast %2 : vector<1x8x1xf32> to vector<8x1xf32>
    %cst = arith.constant 0.001953125 : f32
    %4 = vector.broadcast %cst : f32 to vector<8x1xf32>
    %5 = arith.mulf %3, %4 : vector<8x1xf32>
    %c0_5 = arith.constant 0 : index
    %c0_6 = arith.constant 0 : index
    %c0_7 = arith.constant 0 : index
    %6 = vector.load %arg4[%c0_5, %c0_6, %c0_7] : memref<1x8x1xf32, #tpu.memory_space<vmem>>, vector<1x8x1xf32>
    %7 = vector.shape_cast %6 : vector<1x8x1xf32> to vector<8x1xf32>
    %cst_8 = arith.constant 0.001953125 : f32
    %8 = vector.broadcast %cst_8 : f32 to vector<8x1xf32>
    %9 = arith.mulf %7, %8 : vector<8x1xf32>
    %10 = arith.mulf %5, %5 : vector<8x1xf32>
    %11 = arith.subf %9, %10 : vector<8x1xf32>
    %cst_9 = arith.constant 0.000000e+00 : f32
    %12 = vector.broadcast %cst_9 : f32 to vector<8x1xf32>
    %13 = arith.maximumf %11, %12 : vector<8x1xf32>
    %c0_10 = arith.constant 0 : index
    %c0_11 = arith.constant 0 : index
    %14 = vector.load %arg5[%c0_10, %c0_11] : memref<8x1xf32, #tpu.memory_space<vmem>>, vector<8x1xf32>
    %cst_12 = arith.constant 9.99999974E-6 : f32
    %15 = vector.broadcast %cst_12 : f32 to vector<8x1xf32>
    %16 = arith.addf %13, %15 : vector<8x1xf32>
    %17 = math.rsqrt %16 : vector<8x1xf32>
    %18 = arith.mulf %14, %17 : vector<8x1xf32>
    %c0_13 = arith.constant 0 : index
    %c0_14 = arith.constant 0 : index
    %19 = vector.load %arg6[%c0_13, %c0_14] : memref<8x1xf32, #tpu.memory_space<vmem>>, vector<8x1xf32>
    %20 = arith.mulf %5, %18 : vector<8x1xf32>
    %21 = arith.subf %19, %20 : vector<8x1xf32>
    %22 = vector.broadcast %18 : vector<8x1xf32> to vector<8x512xf32>
    %23 = arith.mulf %1, %22 : vector<8x512xf32>
    %24 = vector.broadcast %21 : vector<8x1xf32> to vector<8x512xf32>
    %25 = arith.addf %23, %24 : vector<8x512xf32>
    %cst_15 = arith.constant 0.000000e+00 : f32
    %26 = vector.broadcast %cst_15 : f32 to vector<8x512xf32>
    %27 = arith.cmpf oge, %25, %26 : vector<8x512xf32>
    %cst_16 = arith.constant 0.00999999977 : f32
    %28 = vector.broadcast %cst_16 : f32 to vector<8x512xf32>
    %29 = arith.mulf %28, %25 : vector<8x512xf32>
    %30 = arith.select %27, %25, %29 : vector<8x512xi1>, vector<8x512xf32>
    %c0_17 = arith.constant 0 : index
    %c0_18 = arith.constant 0 : index
    %c0_19 = arith.constant 0 : index
    %31 = vector.load %arg7[%c0_17, %c0_18, %c0_19] : memref<1x8x512xf32, #tpu.memory_space<vmem>>, vector<1x8x512xf32>
    %32 = vector.shape_cast %31 : vector<1x8x512xf32> to vector<8x512xf32>
    %33 = vector.shape_cast %30 : vector<8x512xf32> to vector<1x8x512xf32>
    tpu.vector_store %arg7[%c0_17, %c0_18, %c0_19], %33 {strides = array<i32>} : memref<1x8x512xf32, #tpu.memory_space<vmem>>, vector<1x8x512xf32>,
    return
  }
  func.func @transform_0(%arg0: i32, %arg1: i32) -> (i32, i32, i32) {
    %c0_i32 = arith.constant 0 : i32
    %c0_i32_0 = arith.constant 0 : i32
    return %arg0, %c0_i32, %arg1 : i32, i32, i32
  }
  func.func @transform_1(%arg0: i32, %arg1: i32) -> (i32, i32, i32) {
    %c0_i32 = arith.constant 0 : i32
    %c0_i32_0 = arith.constant 0 : i32
    %c0_i32_1 = arith.constant 0 : i32
    return %arg0, %c0_i32, %c0_i32_0 : i32, i32, i32
  }
  func.func @transform_2(%arg0: i32, %arg1: i32) -> (i32, i32, i32) {
    %c0_i32 = arith.constant 0 : i32
    %c0_i32_0 = arith.constant 0 : i32
    %c0_i32_1 = arith.constant 0 : i32
    return %arg0, %c0_i32, %c0_i32_0 : i32, i32, i32
  }
  func.func @transform_3(%arg0: i32, %arg1: i32) -> (i32, i32) {
    %c0_i32 = arith.constant 0 : i32
    %c0_i32_0 = arith.constant 0 : i32
    %c0_i32_1 = arith.constant 0 : i32
    return %c0_i32, %c0_i32_0 : i32, i32
  }
  func.func @transform_4(%arg0: i32, %arg1: i32) -> (i32, i32) {
    %c0_i32 = arith.constant 0 : i32
    %c0_i32_0 = arith.constant 0 : i32
    %c0_i32_1 = arith.constant 0 : i32
    return %c0_i32, %c0_i32_0 : i32, i32
  }
  func.func @transform_5(%arg0: i32, %arg1: i32) -> (i32, i32, i32) {
    %c0_i32 = arith.constant 0 : i32
    %c0_i32_0 = arith.constant 0 : i32
    return %arg0, %c0_i32, %arg1 : i32, i32, i32
  }
}

</mosaic_0001>

<llo_original>
// kernel: conv_layer_forward.3
$region0: #{conv_layer_forward.3}
  #allocation0 [shape = 'u32[]', space=smem, size = 0x4, offset = 0x4, fixed_abs, tag = 'smem constant byte address 0x4 - core index']
  #allocation1 [shape = 'u32[144,128]{1,0:T(1,128)}', space=vmem, size = 0x12000, scoped, tag = 'internal scratch']
  %s0 = inlined_call_operand.vmem [shape: f32[2,8,512], index: 0, kind: input, shape index: {}]
  %s1 = inlined_call_operand.vmem [shape: f32[2,8,1], index: 1, kind: input, shape index: {}]
  %s2 = inlined_call_operand.vmem [shape: f32[2,8,1], index: 2, kind: input, shape index: {}]
  %s3 = inlined_call_operand.vmem [shape: f32[8,1], index: 3, kind: input, shape index: {}]
  %s4 = inlined_call_operand.vmem [shape: f32[8,1], index: 4, kind: input, shape index: {}]
  %s5 = inlined_call_operand.vmem [shape: f32[2,8,512], index: 5, kind: output, shape index: {}]
  %s6 = sld [smem:[#allocation0]]
  $region53: #{conv_layer_forward.3} parent=0
    _
  %s8 = ssub.s32 1, %s6
  %s9 = scalar_select 0, %s8, %s6
  loop: start=0, step=1, limit=4
  $region2: #{conv_layer_forward.3} parent=0 // loop_pre_header
    _
  $region3: #{conv_layer_forward.3} parent=0 // loop_header
    %s11 = sphi 0, %s15
    %p12 = scmp.ge.s32.totalorder %s11, 4
    %s18 = sphi 0, %s30
    %s19 = sphi 0, %s26
    %s20 = sphi 0, %s18
    %s21 = sphi 0, %s19
    %s22 = sphi 0, %s20
    %s23 = sphi 0, %s21
    %s35 = sphi 0, %s37
    %s38 = sphi 0, %s35
    %s39 = sphi 0, %s38
    %s55 = sphi 0, %s39
    %s61 = sphi 0, %s63
    %s64 = sphi 0, %s61
    %s65 = sphi 0, %s64
    %s81 = sphi 0, %s65
    %s87 = sphi 0, %s89
    %s90 = sphi 0, %s87
    %s91 = sphi 0, %s90
    %s107 = sphi 0, %s91
    %s111 = sphi 0, %s111
    %s113 = sphi 0, %s111
    %s114 = sphi 0, %s113
    %s128 = sphi 0, %s114
    %s132 = sphi 0, %s132
    %s134 = sphi 0, %s132
    %s135 = sphi 0, %s134
    %s149 = sphi 0, %s135
    %s157 = sphi 0, %s159
    %s160 = sphi 0, %s157
    %s161 = sphi 0, %s160
    %s177 = sphi 0, %s161
  $region4: #{conv_layer_forward.3} parent=0 // loop_header_branch
    %14 = sbr.rel (%p12) target = $region8
  $region5: #{conv_layer_forward.3} parent=0 // loop_body
    %s16 = ssub.s32 %s11, 1
    %s17 = ssub.s32 %s11, 2
    %s24 = sadd.s32 1, %s19
    %p25 = scmp.ge.s32.totalorder %s24, 1
    %s26 = scalar_select %p25, 0, %s24
    %s27 = sadd.s32 1, %s18
    %s28 = scalar_select %p25, %s27, %s18
    %p29 = scmp.ge.s32.totalorder %s28, 2
    %s30 = scalar_select %p29, 0, %s28
    %s31 = ssub.s32 %s18, %s30
    %s32 = ssub.s32 %s19, %s26
    %s33 = sor.u32 %s31, %s32
    %p34 = scmp.eq.s32.totalorder %s33, 0
    %s36 = sadd.s32 %s35, 1
    %s37 = scalar_select %p34, %s35, %s36
    %p40 = pneg %p34
    %p41 = scmp.eq.s32.totalorder %s11, 1
    %p42 = por %p40, %p41
    %p43 = scmp.ne.s32.totalorder %s35, %s38
    %p44 = scmp.eq.s32.totalorder %s11, 0
    %p45 = por %p43, %p44
    %p46 = scmp.ne.s32.totalorder %s35, %s38
    %p47 = scmp.eq.s32.totalorder %s16, 1
    %p48 = por %p46, %p47
    %p49 = scmp.ne.s32.totalorder %s38, %s39
    %p50 = scmp.eq.s32.totalorder %s16, 0
    %p51 = por %p49, %p50
    %p52 = scmp.ne.s32.totalorder %s38, %s39
    %p53 = scmp.eq.s32.totalorder %s17, 1
    %p54 = por %p52, %p53
    %p56 = scmp.ne.s32.totalorder %s39, %s55
    %p57 = scmp.eq.s32.totalorder %s17, 0
    %p58 = por %p56, %p57
    %s59 = ssub.s32 %s18, %s30
    %p60 = scmp.eq.s32.totalorder %s59, 0
    %s62 = sadd.s32 %s61, 1
    %s63 = scalar_select %p60, %s61, %s62
    %p66 = pneg %p60
    %p67 = scmp.eq.s32.totalorder %s11, 1
    %p68 = por %p66, %p67
    %p69 = scmp.ne.s32.totalorder %s61, %s64
    %p70 = scmp.eq.s32.totalorder %s11, 0
    %p71 = por %p69, %p70
    %p72 = scmp.ne.s32.totalorder %s61, %s64
    %p73 = scmp.eq.s32.totalorder %s16, 1
    %p74 = por %p72, %p73
    %p75 = scmp.ne.s32.totalorder %s64, %s65
    %p76 = scmp.eq.s32.totalorder %s16, 0
    %p77 = por %p75, %p76
    %p78 = scmp.ne.s32.totalorder %s64, %s65
    %p79 = scmp.eq.s32.totalorder %s17, 1
    %p80 = por %p78, %p79
    %p82 = scmp.ne.s32.totalorder %s65, %s81
    %p83 = scmp.eq.s32.totalorder %s17, 0
    %p84 = por %p82, %p83
    %s85 = ssub.s32 %s18, %s30
    %p86 = scmp.eq.s32.totalorder %s85, 0
    %s88 = sadd.s32 %s87, 1
    %s89 = scalar_select %p86, %s87, %s88
    %p92 = pneg %p86
    %p93 = scmp.eq.s32.totalorder %s11, 1
    %p94 = por %p92, %p93
    %p95 = scmp.ne.s32.totalorder %s87, %s90
    %p96 = scmp.eq.s32.totalorder %s11, 0
    %p97 = por %p95, %p96
    %p98 = scmp.ne.s32.totalorder %s87, %s90
    %p99 = scmp.eq.s32.totalorder %s16, 1
    %p100 = por %p98, %p99
    %p101 = scmp.ne.s32.totalorder %s90, %s91
    %p102 = scmp.eq.s32.totalorder %s16, 0
    %p103 = por %p101, %p102
    %p104 = scmp.ne.s32.totalorder %s90, %s91
    %p105 = scmp.eq.s32.totalorder %s17, 1
    %p106 = por %p104, %p105
    %p108 = scmp.ne.s32.totalorder %s91, %s107
    %p109 = scmp.eq.s32.totalorder %s17, 0
    %p110 = por %p108, %p109
    %s112 = sadd.s32 %s111, 1
    %p115 = scmp.eq.s32.totalorder %s11, 1
    %p116 = scmp.ne.s32.totalorder %s111, %s113
    %p117 = scmp.eq.s32.totalorder %s11, 0
    %p118 = por %p116, %p117
    %p119 = scmp.ne.s32.totalorder %s111, %s113
    %p120 = scmp.eq.s32.totalorder %s16, 1
    %p121 = por %p119, %p120
    %p122 = scmp.ne.s32.totalorder %s113, %s114
    %p123 = scmp.eq.s32.totalorder %s16, 0
    %p124 = por %p122, %p123
    %p125 = scmp.ne.s32.totalorder %s113, %s114
    %p126 = scmp.eq.s32.totalorder %s17, 1
    %p127 = por %p125, %p126
    %p129 = scmp.ne.s32.totalorder %s114, %s128
    %p130 = scmp.eq.s32.totalorder %s17, 0
    %p131 = por %p129, %p130
    %s133 = sadd.s32 %s132, 1
    %p136 = scmp.eq.s32.totalorder %s11, 1
    %p137 = scmp.ne.s32.totalorder %s132, %s134
    %p138 = scmp.eq.s32.totalorder %s11, 0
    %p139 = por %p137, %p138
    %p140 = scmp.ne.s32.totalorder %s132, %s134
    %p141 = scmp.eq.s32.totalorder %s16, 1
    %p142 = por %p140, %p141
    %p143 = scmp.ne.s32.totalorder %s134, %s135
    %p144 = scmp.eq.s32.totalorder %s16, 0
    %p145 = por %p143, %p144
    %p146 = scmp.ne.s32.totalorder %s134, %s135
    %p147 = scmp.eq.s32.totalorder %s17, 1
    %p148 = por %p146, %p147
    %p150 = scmp.ne.s32.totalorder %s135, %s149
    %p151 = scmp.eq.s32.totalorder %s17, 0
    %p152 = por %p150, %p151
    %s153 = ssub.s32 %s18, %s30
    %s154 = ssub.s32 %s19, %s26
    %s155 = sor.u32 %s153, %s154
    %p156 = scmp.eq.s32.totalorder %s155, 0
    %s158 = sadd.s32 %s157, 1
    %s159 = scalar_select %p156, %s157, %s158
    %p162 = pneg %p156
    %p163 = scmp.eq.s32.totalorder %s11, 1
    %p164 = por %p162, %p163
    %p165 = scmp.ne.s32.totalorder %s157, %s160
    %p166 = scmp.eq.s32.totalorder %s11, 0
    %p167 = por %p165, %p166
    %p168 = scmp.ne.s32.totalorder %s157, %s160
    %p169 = scmp.eq.s32.totalorder %s16, 1
    %p170 = por %p168, %p169
    %p171 = scmp.ne.s32.totalorder %s160, %s161
    %p172 = scmp.eq.s32.totalorder %s16, 0
    %p173 = por %p171, %p172
    %p174 = scmp.ne.s32.totalorder %s160, %s161
    %p175 = scmp.eq.s32.totalorder %s17, 1
    %p176 = por %p174, %p175
    %p178 = scmp.ne.s32.totalorder %s161, %s177
    %p179 = scmp.eq.s32.totalorder %s17, 0
    %p180 = por %p178, %p179
    %p181 = scmp.le.s32.totalorder 1, %s11
    %p182 = scmp.lt.s32.totalorder %s11, 3
    %p183 = pnand %p181, %p182
    %p184 = pneg %p183
    // Predicated region
    $region9: #{conv_layer_forward.3} parent=5 // pred_check
      _
    $region10: #{conv_layer_forward.3} parent=5 // pred_check_branch
      %186 = sbr.rel (%p183) target = $region12
    $region11: #{conv_layer_forward.3} parent=5 // pred_region
      %s187 = ssub.s32 %s11, 1
      // Predicated region
      $region13: #{conv_layer_forward.3} parent=11 // pred_check
        %p188 = pneg %p124
      $region14: #{conv_layer_forward.3} parent=11 // pred_check_branch
        %190 = sbr.rel (%p188) target = $region16
      $region15: #{conv_layer_forward.3} parent=11 // pred_region
        _
      $region16: #{conv_layer_forward.3} parent=11 // pred_fallthru
        _
      // Predicated region
      $region17: #{conv_layer_forward.3} parent=11 // pred_check
        %p191 = pneg %p145
      $region18: #{conv_layer_forward.3} parent=11 // pred_check_branch
        %193 = sbr.rel (%p191) target = $region20
      $region19: #{conv_layer_forward.3} parent=11 // pred_region
        _
      $region20: #{conv_layer_forward.3} parent=11 // pred_fallthru
        _
    $region12: #{conv_layer_forward.3} parent=5 // pred_fallthru
      _
    %p194 = scmp.lt.s32.totalorder %s11, 2
    // Predicated region
    $region21: #{conv_layer_forward.3} parent=5 // pred_check
      %p195 = pneg %p194
    $region22: #{conv_layer_forward.3} parent=5 // pred_check_branch
      %197 = sbr.rel (%p195) target = $region24
    $region23: #{conv_layer_forward.3} parent=5 // pred_region
      // Predicated region
      $region25: #{conv_layer_forward.3} parent=23 // pred_check
        %p198 = pneg %p45
      $region26: #{conv_layer_forward.3} parent=23 // pred_check_branch
        %200 = sbr.rel (%p198) target = $region28
      $region27: #{conv_layer_forward.3} parent=23 // pred_region
        %s201 = smul.u32 4, %s19
        %p202 = scmp.lt.s32.totalorder %s18, 1
        %s203 = scalar_select %p202, %s18, 1
        %p204 = scmp.lt.s32.totalorder %s201, 3
        %s205 = scalar_select %p204, %s201, 3
        %s206 = smul.addr %s203, 4
        %s207 = sadd.s32 %s205, %s206
        %s208 = smul.addr %s207, 8
        %s209 = scalar_lea.vmem %s0, %s208
        %s210 = smul.u32 4, %s19
      $region28: #{conv_layer_forward.3} parent=23 // pred_fallthru
        _
      // Predicated region
      $region29: #{conv_layer_forward.3} parent=23 // pred_check
        %p211 = pneg %p71
      $region30: #{conv_layer_forward.3} parent=23 // pred_check_branch
        %213 = sbr.rel (%p211) target = $region32
      $region31: #{conv_layer_forward.3} parent=23 // pred_region
        %p214 = scmp.lt.s32.totalorder %s18, 1
        %s215 = scalar_select %p214, %s18, 1
        %s216 = smul.addr %s215, 8
        %s217 = scalar_lea.vmem %s1, %s216
      $region32: #{conv_layer_forward.3} parent=23 // pred_fallthru
        _
      // Predicated region
      $region33: #{conv_layer_forward.3} parent=23 // pred_check
        %p218 = pneg %p97
      $region34: #{conv_layer_forward.3} parent=23 // pred_check_branch
        %220 = sbr.rel (%p218) target = $region36
      $region35: #{conv_layer_forward.3} parent=23 // pred_region
        %p221 = scmp.lt.s32.totalorder %s18, 1
        %s222 = scalar_select %p221, %s18, 1
        %s223 = smul.addr %s222, 8
        %s224 = scalar_lea.vmem %s2, %s223
      $region36: #{conv_layer_forward.3} parent=23 // pred_fallthru
        _
    $region24: #{conv_layer_forward.3} parent=5 // pred_fallthru
      _
    %p225 = scmp.le.s32.totalorder 1, %s11
    %p226 = scmp.lt.s32.totalorder %s11, 3
    %p227 = pnand %p225, %p226
    %p228 = pneg %p227
    // Predicated region
    $region37: #{conv_layer_forward.3} parent=5 // pred_check
      _
    $region38: #{conv_layer_forward.3} parent=5 // pred_check_branch
      %230 = sbr.rel (%p227) target = $region40
    $region39: #{conv_layer_forward.3} parent=5 // pred_region
      %s231 = ssub.s32 %s11, 1
      %s232 = smul.u32 4, %s21
      %p233 = scmp.lt.s32.totalorder %s20, 1
      %s234 = scalar_select %p233, %s20, 1
      %p235 = scmp.lt.s32.totalorder %s232, 3
      %s236 = scalar_select %p235, %s232, 3
      %s237 = smul.addr %s234, 4
      %s238 = sadd.s32 %s236, %s237
      %s239 = smul.addr %s238, 8
      %s240 = scalar_lea.vmem %s0, %s239
      %p241 = pneg %p51
      %p242 = pneg %p48
      %p243 = scmp.lt.s32.totalorder %s20, 1
      %s244 = scalar_select %p243, %s20, 1
      %s245 = smul.addr %s244, 8
      %s246 = scalar_lea.vmem %s1, %s245
      %p247 = pneg %p77
      %p248 = pneg %p74
      %p249 = scmp.lt.s32.totalorder %s20, 1
      %s250 = scalar_select %p249, %s20, 1
      %s251 = smul.addr %s250, 8
      %s252 = scalar_lea.vmem %s2, %s251
      %p253 = pneg %p103
      %p254 = pneg %p100
      %p255 = pneg %p124
      %p256 = pneg %p121
      %p257 = pneg %p145
      %p258 = pneg %p142
      %p259 = pneg %p173
      %p260 = pneg %p170
      %s261 = smul.u32 4, %s21
      %p262 = scmp.lt.s32.totalorder %s20, 1
      %s263 = scalar_select %p262, %s20, 1
      %p264 = scmp.lt.s32.totalorder %s261, 3
      %s265 = scalar_select %p264, %s261, 3
      %s266 = smul.addr %s263, 4
      %s267 = sadd.s32 %s265, %s266
      %s268 = smul.addr %s267, 8
      %s269 = scalar_lea.vmem %s5, %s268
      %s270 = smul.u32 4, %s21
      %p271 = scmp.lt.s32.totalorder %s20, 1
      %s272 = scalar_select %p271, %s20, 1
      %p273 = scmp.lt.s32.totalorder %s270, 3
      %s274 = scalar_select %p273, %s270, 3
      %s275 = smul.addr %s272, 4
      %s276 = sadd.s32 %s274, %s275
      %s277 = smul.addr %s276, 8
      %s278 = scalar_lea.vmem %s0, %s277
      %s279 = smul.u32 4, %s21
      %p280 = scmp.lt.s32.totalorder %s20, 1
      %s281 = scalar_select %p280, %s20, 1
      %s282 = smul.addr %s281, 8
      %s283 = scalar_lea.vmem %s1, %s282
      %p284 = scmp.lt.s32.totalorder %s20, 1
      %s285 = scalar_select %p284, %s20, 1
      %s286 = smul.addr %s285, 8
      %s287 = scalar_lea.vmem %s2, %s286
      %s288 = smul.u32 4, %s21
      %p289 = scmp.lt.s32.totalorder %s20, 1
      %s290 = scalar_select %p289, %s20, 1
      %p291 = scmp.lt.s32.totalorder %s288, 3
      %s292 = scalar_select %p291, %s288, 3
      %s293 = smul.addr %s290, 4
      %s294 = sadd.s32 %s292, %s293
      %s295 = smul.addr %s294, 8
      %s296 = scalar_lea.vmem %s5, %s295
      %s297 = smul.u32 4, %s21
      %v298 = vld [vmem:[%s278] sm:$0xff]
      %v299 = vld [vmem:[%s278 + $0x8] sm:$0xff]
      %v300 = vld [vmem:[%s278 + $0x10] sm:$0xff]
      %v301 = vld [vmem:[%s278 + $0x18] sm:$0xff]
      %v302 = vld [vmem:[%s283] sm:$0xff]
      %v303 = vmul.f32 %v302, 0.001953125
      %v304 = vld [vmem:[%s287] sm:$0xff]
      %v305 = vmul.f32 %v304, 0.001953125
      %v306 = vmul.f32 %v303, %v303
      %v307 = vsub.f32 %v305, %v306
      %v308 = vmax.f32 %v307, 0.0
      %v309 = vld [vmem:[%s3] sm:$0xff]
      %v310 = vadd.f32 %v308, 1e-05
      %v311 = vrsqrt.pop %v310
      %v312 = vmul.f32 %v309, %v311
      %v313 = vld [vmem:[%s4] sm:$0xff]
      %v314 = vmul.f32 %v303, %v312
      %v315 = vsub.f32 %v313, %v314
      %317 = vset.pattern.permute.xlu0 0
      %318 = vperm.xlu0 %317, %v312
      %v319 = vpop.permute.xlu0 %318
      %v321 = vmul.f32 %v298, %v319
      %v322 = vmul.f32 %v299, %v319
      %v323 = vmul.f32 %v300, %v319
      %v324 = vmul.f32 %v301, %v319
      %326 = vset.pattern.permute.xlu0 0
      %327 = vperm.xlu0 %326, %v315
      %v328 = vpop.permute.xlu0 %327
      %v330 = vadd.f32 %v321, %v328
      %v331 = vadd.f32 %v322, %v328
      %v332 = vadd.f32 %v323, %v328
      %v333 = vadd.f32 %v324, %v328
      %vm334 = vcmp.ge.f32.partialorder %v330, 0.0
      %vm335 = vcmp.ge.f32.partialorder %v331, 0.0
      %vm336 = vcmp.ge.f32.partialorder %v332, 0.0
      %vm337 = vcmp.ge.f32.partialorder %v333, 0.0
      %v338 = vmul.f32 %v330, 0.01
      %v339 = vmul.f32 %v331, 0.01
      %v340 = vmul.f32 %v332, 0.01
      %v341 = vmul.f32 %v333, 0.01
      %v342 = vsel %vm334, %v330, %v338
      %v343 = vsel %vm335, %v331, %v339
      %v344 = vsel %vm336, %v332, %v340
      %v345 = vsel %vm337, %v333, %v341
      %346 = vst [vmem:[%s296] sm:$0xff] %v342
      %347 = vst [vmem:[%s296 + $0x8] sm:$0xff] %v343
      %348 = vst [vmem:[%s296 + $0x10] sm:$0xff] %v344
      %349 = vst [vmem:[%s296 + $0x18] sm:$0xff] %v345
      %s350 = smul.u32 4, %s21
      %p351 = scmp.lt.s32.totalorder %s20, 1
      %s352 = scalar_select %p351, %s20, 1
      %p353 = scmp.lt.s32.totalorder %s350, 3
      %s354 = scalar_select %p353, %s350, 3
      %s355 = smul.addr %s352, 4
      %s356 = sadd.s32 %s354, %s355
      %s357 = smul.addr %s356, 8
      %s358 = scalar_lea.vmem %s5, %s357
      // Predicated region
      $region41: #{conv_layer_forward.3} parent=39 // pred_check
        %p359 = pneg %p170
      $region42: #{conv_layer_forward.3} parent=39 // pred_check_branch
        %361 = sbr.rel (%p359) target = $region44
      $region43: #{conv_layer_forward.3} parent=39 // pred_region
        %s362 = smul.u32 4, %s21
      $region44: #{conv_layer_forward.3} parent=39 // pred_fallthru
        _
    $region40: #{conv_layer_forward.3} parent=5 // pred_fallthru
      _
    %p363 = scmp.le.s32.totalorder 2, %s11
    // Predicated region
    $region45: #{conv_layer_forward.3} parent=5 // pred_check
      %p364 = pneg %p363
    $region46: #{conv_layer_forward.3} parent=5 // pred_check_branch
      %366 = sbr.rel (%p364) target = $region48
    $region47: #{conv_layer_forward.3} parent=5 // pred_region
      %s367 = ssub.s32 %s11, 2
      // Predicated region
      $region49: #{conv_layer_forward.3} parent=47 // pred_check
        %p368 = pneg %p176
      $region50: #{conv_layer_forward.3} parent=47 // pred_check_branch
        %370 = sbr.rel (%p368) target = $region52
      $region51: #{conv_layer_forward.3} parent=47 // pred_region
        %s371 = smul.u32 4, %s23
        %p372 = scmp.lt.s32.totalorder %s22, 1
        %s373 = scalar_select %p372, %s22, 1
        %p374 = scmp.lt.s32.totalorder %s371, 3
        %s375 = scalar_select %p374, %s371, 3
        %s376 = smul.addr %s373, 4
        %s377 = sadd.s32 %s375, %s376
        %s378 = smul.addr %s377, 8
        %s379 = scalar_lea.vmem %s5, %s378
      $region52: #{conv_layer_forward.3} parent=47 // pred_fallthru
        _
    $region48: #{conv_layer_forward.3} parent=5 // pred_fallthru
      _
  $region6: #{conv_layer_forward.3} parent=0 // loop_footer
    %s15 = sadd.s32 1, %s11
  $region7: #{conv_layer_forward.3} parent=0 // loop_footer_branch
    %10 = sbr.rel target = $region3
  $region8: #{conv_layer_forward.3} parent=0 // loop_exit
    _

// kernel: conv_layer_forward.2
$region0: #{conv_layer_forward.2}
  #allocation0 [shape = 'u32[]', space=smem, size = 0x4, offset = 0x4, fixed_abs, tag = 'smem constant byte address 0x4 - core index']
  #allocation1 [shape = 'u32[144,128]{1,0:T(1,128)}', space=vmem, size = 0x12000, scoped, tag = 'internal scratch']
  #allocation2 [shape = 'f32[8,512]{1,0:T(8,128)}', space=vmem, size = 0x4000, scoped, tag = 'scratch operand']
  %s0 = inlined_call_operand.vmem [shape: f32[2,128,512], index: 0, kind: input, shape index: {}]
  %s1 = inlined_call_operand.vmem [shape: f32[8,128], index: 1, kind: input, shape index: {}]
  %s2 = inlined_call_operand.vmem [shape: f32[2,8,512], index: 2, kind: output, shape index: {0}]
  %s3 = inlined_call_operand.vmem [shape: f32[2,8,1], index: 3, kind: output, shape index: {1}]
  %s4 = inlined_call_operand.vmem [shape: f32[2,8,1], index: 4, kind: output, shape index: {2}]
  %5 = xla_tuple %s2, %s3, %s4
  %s6 = sld [smem:[#allocation0]]
  $region69: #{conv_layer_forward.2} parent=0
    _
  %s8 = ssub.s32 1, %s6
  %s9 = scalar_select 0, %s8, %s6
  loop: start=0, step=1, limit=4
  $region2: #{conv_layer_forward.2} parent=0 // loop_pre_header
    _
  $region3: #{conv_layer_forward.2} parent=0 // loop_header
    %s11 = sphi 0, %s15
    %p12 = scmp.ge.s32.totalorder %s11, 4
    %s18 = sphi 0, %s37
    %s19 = sphi 0, %s33
    %s20 = sphi 0, %s29
    %s21 = sphi 0, %s18
    %s22 = sphi 0, %s19
    %s23 = sphi 0, %s20
    %s24 = sphi 0, %s21
    %s25 = sphi 0, %s22
    %s26 = sphi 0, %s23
    %s44 = sphi 0, %s46
    %s47 = sphi 0, %s44
    %s48 = sphi 0, %s47
    %s64 = sphi 0, %s48
    %s70 = sphi 0, %s72
    %s73 = sphi 0, %s70
    %s74 = sphi 0, %s73
    %s90 = sphi 0, %s74
    %s98 = sphi 0, %s100
    %s101 = sphi 0, %s98
    %s102 = sphi 0, %s101
    %s118 = sphi 0, %s102
    %s124 = sphi 0, %s126
    %s127 = sphi 0, %s124
    %s128 = sphi 0, %s127
    %s144 = sphi 0, %s128
    %s150 = sphi 0, %s152
    %s153 = sphi 0, %s150
    %s154 = sphi 0, %s153
    %s170 = sphi 0, %s154
  $region4: #{conv_layer_forward.2} parent=0 // loop_header_branch
    %14 = sbr.rel (%p12) target = $region8
  $region5: #{conv_layer_forward.2} parent=0 // loop_body
    %s16 = ssub.s32 %s11, 1
    %s17 = ssub.s32 %s11, 2
    %s27 = sadd.s32 1, %s20
    %p28 = scmp.ge.s32.totalorder %s27, 1
    %s29 = scalar_select %p28, 0, %s27
    %s30 = sadd.s32 1, %s19
    %s31 = scalar_select %p28, %s30, %s19
    %p32 = scmp.ge.s32.totalorder %s31, 1
    %s33 = scalar_select %p32, 0, %s31
    %s34 = sadd.s32 1, %s18
    %s35 = scalar_select %p32, %s34, %s18
    %p36 = scmp.ge.s32.totalorder %s35, 2
    %s37 = scalar_select %p36, 0, %s35
    %s38 = ssub.s32 %s18, %s37
    %s39 = ssub.s32 %s20, %s29
    %s40 = sor.u32 %s38, %s39
    %s41 = ssub.s32 %s19, %s33
    %s42 = sor.u32 %s40, %s41
    %p43 = scmp.eq.s32.totalorder %s42, 0
    %s45 = sadd.s32 %s44, 1
    %s46 = scalar_select %p43, %s44, %s45
    %p49 = pneg %p43
    %p50 = scmp.eq.s32.totalorder %s11, 1
    %p51 = por %p49, %p50
    %p52 = scmp.ne.s32.totalorder %s44, %s47
    %p53 = scmp.eq.s32.totalorder %s11, 0
    %p54 = por %p52, %p53
    %p55 = scmp.ne.s32.totalorder %s44, %s47
    %p56 = scmp.eq.s32.totalorder %s16, 1
    %p57 = por %p55, %p56
    %p58 = scmp.ne.s32.totalorder %s47, %s48
    %p59 = scmp.eq.s32.totalorder %s16, 0
    %p60 = por %p58, %p59
    %p61 = scmp.ne.s32.totalorder %s47, %s48
    %p62 = scmp.eq.s32.totalorder %s17, 1
    %p63 = por %p61, %p62
    %p65 = scmp.ne.s32.totalorder %s48, %s64
    %p66 = scmp.eq.s32.totalorder %s17, 0
    %p67 = por %p65, %p66
    %s68 = ssub.s32 %s20, %s29
    %p69 = scmp.eq.s32.totalorder %s68, 0
    %s71 = sadd.s32 %s70, 1
    %s72 = scalar_select %p69, %s70, %s71
    %p75 = pneg %p69
    %p76 = scmp.eq.s32.totalorder %s11, 1
    %p77 = por %p75, %p76
    %p78 = scmp.ne.s32.totalorder %s70, %s73
    %p79 = scmp.eq.s32.totalorder %s11, 0
    %p80 = por %p78, %p79
    %p81 = scmp.ne.s32.totalorder %s70, %s73
    %p82 = scmp.eq.s32.totalorder %s16, 1
    %p83 = por %p81, %p82
    %p84 = scmp.ne.s32.totalorder %s73, %s74
    %p85 = scmp.eq.s32.totalorder %s16, 0
    %p86 = por %p84, %p85
    %p87 = scmp.ne.s32.totalorder %s73, %s74
    %p88 = scmp.eq.s32.totalorder %s17, 1
    %p89 = por %p87, %p88
    %p91 = scmp.ne.s32.totalorder %s74, %s90
    %p92 = scmp.eq.s32.totalorder %s17, 0
    %p93 = por %p91, %p92
    %s94 = ssub.s32 %s18, %s37
    %s95 = ssub.s32 %s19, %s33
    %s96 = sor.u32 %s94, %s95
    %p97 = scmp.eq.s32.totalorder %s96, 0
    %s99 = sadd.s32 %s98, 1
    %s100 = scalar_select %p97, %s98, %s99
    %p103 = pneg %p97
    %p104 = scmp.eq.s32.totalorder %s11, 1
    %p105 = por %p103, %p104
    %p106 = scmp.ne.s32.totalorder %s98, %s101
    %p107 = scmp.eq.s32.totalorder %s11, 0
    %p108 = por %p106, %p107
    %p109 = scmp.ne.s32.totalorder %s98, %s101
    %p110 = scmp.eq.s32.totalorder %s16, 1
    %p111 = por %p109, %p110
    %p112 = scmp.ne.s32.totalorder %s101, %s102
    %p113 = scmp.eq.s32.totalorder %s16, 0
    %p114 = por %p112, %p113
    %p115 = scmp.ne.s32.totalorder %s101, %s102
    %p116 = scmp.eq.s32.totalorder %s17, 1
    %p117 = por %p115, %p116
    %p119 = scmp.ne.s32.totalorder %s102, %s118
    %p120 = scmp.eq.s32.totalorder %s17, 0
    %p121 = por %p119, %p120
    %s122 = ssub.s32 %s18, %s37
    %p123 = scmp.eq.s32.totalorder %s122, 0
    %s125 = sadd.s32 %s124, 1
    %s126 = scalar_select %p123, %s124, %s125
    %p129 = pneg %p123
    %p130 = scmp.eq.s32.totalorder %s11, 1
    %p131 = por %p129, %p130
    %p132 = scmp.ne.s32.totalorder %s124, %s127
    %p133 = scmp.eq.s32.totalorder %s11, 0
    %p134 = por %p132, %p133
    %p135 = scmp.ne.s32.totalorder %s124, %s127
    %p136 = scmp.eq.s32.totalorder %s16, 1
    %p137 = por %p135, %p136
    %p138 = scmp.ne.s32.totalorder %s127, %s128
    %p139 = scmp.eq.s32.totalorder %s16, 0
    %p140 = por %p138, %p139
    %p141 = scmp.ne.s32.totalorder %s127, %s128
    %p142 = scmp.eq.s32.totalorder %s17, 1
    %p143 = por %p141, %p142
    %p145 = scmp.ne.s32.totalorder %s128, %s144
    %p146 = scmp.eq.s32.totalorder %s17, 0
    %p147 = por %p145, %p146
    %s148 = ssub.s32 %s18, %s37
    %p149 = scmp.eq.s32.totalorder %s148, 0
    %s151 = sadd.s32 %s150, 1
    %s152 = scalar_select %p149, %s150, %s151
    %p155 = pneg %p149
    %p156 = scmp.eq.s32.totalorder %s11, 1
    %p157 = por %p155, %p156
    %p158 = scmp.ne.s32.totalorder %s150, %s153
    %p159 = scmp.eq.s32.totalorder %s11, 0
    %p160 = por %p158, %p159
    %p161 = scmp.ne.s32.totalorder %s150, %s153
    %p162 = scmp.eq.s32.totalorder %s16, 1
    %p163 = por %p161, %p162
    %p164 = scmp.ne.s32.totalorder %s153, %s154
    %p165 = scmp.eq.s32.totalorder %s16, 0
    %p166 = por %p164, %p165
    %p167 = scmp.ne.s32.totalorder %s153, %s154
    %p168 = scmp.eq.s32.totalorder %s17, 1
    %p169 = por %p167, %p168
    %p171 = scmp.ne.s32.totalorder %s154, %s170
    %p172 = scmp.eq.s32.totalorder %s17, 0
    %p173 = por %p171, %p172
    %p174 = scmp.le.s32.totalorder 1, %s11
    %p175 = scmp.lt.s32.totalorder %s11, 3
    %p176 = pnand %p174, %p175
    %p177 = pneg %p176
    // Predicated region
    $region9: #{conv_layer_forward.2} parent=5 // pred_check
      _
    $region10: #{conv_layer_forward.2} parent=5 // pred_check_branch
      %179 = sbr.rel (%p176) target = $region12
    $region11: #{conv_layer_forward.2} parent=5 // pred_region
      %s180 = ssub.s32 %s11, 1
      // Predicated region
      $region13: #{conv_layer_forward.2} parent=11 // pred_check
        %p181 = pneg %p86
      $region14: #{conv_layer_forward.2} parent=11 // pred_check_branch
        %183 = sbr.rel (%p181) target = $region16
      $region15: #{conv_layer_forward.2} parent=11 // pred_region
        %p184 = scmp.lt.s32.totalorder %s23, 0
        %s185 = scalar_select %p184, %s23, 0
        %s186 = smul.addr %s185, 8
        %s187 = scalar_lea.vmem %s1, %s186
      $region16: #{conv_layer_forward.2} parent=11 // pred_fallthru
        _
    $region12: #{conv_layer_forward.2} parent=5 // pred_fallthru
      _
    %p188 = scmp.lt.s32.totalorder %s11, 2
    // Predicated region
    $region17: #{conv_layer_forward.2} parent=5 // pred_check
      %p189 = pneg %p188
    $region18: #{conv_layer_forward.2} parent=5 // pred_check_branch
      %191 = sbr.rel (%p189) target = $region20
    $region19: #{conv_layer_forward.2} parent=5 // pred_region
      // Predicated region
      $region21: #{conv_layer_forward.2} parent=19 // pred_check
        %p192 = pneg %p54
      $region22: #{conv_layer_forward.2} parent=19 // pred_check_branch
        %194 = sbr.rel (%p192) target = $region24
      $region23: #{conv_layer_forward.2} parent=19 // pred_region
        %s195 = smul.u32 16, %s20
        %s196 = smul.u32 4, %s19
        %p197 = scmp.lt.s32.totalorder %s18, 1
        %s198 = scalar_select %p197, %s18, 1
        %p199 = scmp.lt.s32.totalorder %s195, 15
        %s200 = scalar_select %p199, %s195, 15
        %p201 = scmp.lt.s32.totalorder %s196, 3
        %s202 = scalar_select %p201, %s196, 3
        %s203 = smul.addr %s200, 4
        %s204 = sadd.s32 %s202, %s203
        %s205 = smul.addr %s198, 64
        %s206 = sadd.s32 %s204, %s205
        %s207 = smul.addr %s206, 8
        %s208 = scalar_lea.vmem %s0, %s207
        %s209 = smul.u32 16, %s20
        %s210 = smul.u32 4, %s19
      $region24: #{conv_layer_forward.2} parent=19 // pred_fallthru
        _
    $region20: #{conv_layer_forward.2} parent=5 // pred_fallthru
      _
    %p211 = scmp.le.s32.totalorder 1, %s11
    %p212 = scmp.lt.s32.totalorder %s11, 3
    %p213 = pnand %p211, %p212
    %p214 = pneg %p213
    // Predicated region
    $region25: #{conv_layer_forward.2} parent=5 // pred_check
      _
    $region26: #{conv_layer_forward.2} parent=5 // pred_check_branch
      %216 = sbr.rel (%p213) target = $region28
    $region27: #{conv_layer_forward.2} parent=5 // pred_region
      %s217 = ssub.s32 %s11, 1
      %s218 = smul.u32 16, %s23
      %s219 = smul.u32 4, %s22
      %p220 = scmp.lt.s32.totalorder %s21, 1
      %s221 = scalar_select %p220, %s21, 1
      %p222 = scmp.lt.s32.totalorder %s218, 15
      %s223 = scalar_select %p222, %s218, 15
      %p224 = scmp.lt.s32.totalorder %s219, 3
      %s225 = scalar_select %p224, %s219, 3
      %s226 = smul.addr %s223, 4
      %s227 = sadd.s32 %s225, %s226
      %s228 = smul.addr %s221, 64
      %s229 = sadd.s32 %s227, %s228
      %s230 = smul.addr %s229, 8
      %s231 = scalar_lea.vmem %s0, %s230
      %p232 = pneg %p60
      %p233 = pneg %p57
      %p234 = scmp.lt.s32.totalorder %s23, 0
      %s235 = scalar_select %p234, %s23, 0
      %s236 = smul.addr %s235, 8
      %s237 = scalar_lea.vmem %s1, %s236
      %p238 = pneg %p86
      %p239 = pneg %p83
      %p240 = pneg %p114
      %p241 = pneg %p111
      %s242 = smul.u32 4, %s22
      %p243 = scmp.lt.s32.totalorder %s21, 1
      %s244 = scalar_select %p243, %s21, 1
      %p245 = scmp.lt.s32.totalorder %s242, 3
      %s246 = scalar_select %p245, %s242, 3
      %s247 = smul.addr %s244, 4
      %s248 = sadd.s32 %s246, %s247
      %s249 = smul.addr %s248, 8
      %s250 = scalar_lea.vmem %s2, %s249
      %p251 = pneg %p140
      %p252 = pneg %p137
      %p253 = scmp.lt.s32.totalorder %s21, 1
      %s254 = scalar_select %p253, %s21, 1
      %s255 = smul.addr %s254, 8
      %s256 = scalar_lea.vmem %s3, %s255
      %p257 = pneg %p166
      %p258 = pneg %p163
      %p259 = scmp.lt.s32.totalorder %s21, 1
      %s260 = scalar_select %p259, %s21, 1
      %s261 = smul.addr %s260, 8
      %s262 = scalar_lea.vmem %s4, %s261
      %s263 = smul.u32 16, %s23
      %s264 = smul.u32 4, %s22
      %p265 = scmp.lt.s32.totalorder %s21, 1
      %s266 = scalar_select %p265, %s21, 1
      %p267 = scmp.lt.s32.totalorder %s263, 15
      %s268 = scalar_select %p267, %s263, 15
      %p269 = scmp.lt.s32.totalorder %s264, 3
      %s270 = scalar_select %p269, %s264, 3
      %s271 = smul.addr %s268, 4
      %s272 = sadd.s32 %s270, %s271
      %s273 = smul.addr %s266, 64
      %s274 = sadd.s32 %s272, %s273
      %s275 = smul.addr %s274, 8
      %s276 = scalar_lea.vmem %s0, %s275
      %s277 = smul.u32 16, %s23
      %s278 = smul.u32 4, %s22
      %p279 = scmp.lt.s32.totalorder %s23, 0
      %s280 = scalar_select %p279, %s23, 0
      %s281 = smul.addr %s280, 8
      %s282 = scalar_lea.vmem %s1, %s281
      %s283 = smul.u32 4, %s22
      %p284 = scmp.lt.s32.totalorder %s21, 1
      %s285 = scalar_select %p284, %s21, 1
      %p286 = scmp.lt.s32.totalorder %s283, 3
      %s287 = scalar_select %p286, %s283, 3
      %s288 = smul.addr %s285, 4
      %s289 = sadd.s32 %s287, %s288
      %s290 = smul.addr %s289, 8
      %s291 = scalar_lea.vmem %s2, %s290
      %s292 = smul.u32 4, %s22
      %p293 = scmp.lt.s32.totalorder %s21, 1
      %s294 = scalar_select %p293, %s21, 1
      %s295 = smul.addr %s294, 8
      %s296 = scalar_lea.vmem %s3, %s295
      %p297 = scmp.lt.s32.totalorder %s21, 1
      %s298 = scalar_select %p297, %s21, 1
      %s299 = smul.addr %s298, 8
      %s300 = scalar_lea.vmem %s4, %s299
      %p301 = scmp.eq.s32.totalorder %s22, 0
      %p302 = scmp.eq.s32.totalorder %s23, 0
      %p303 = pnand %p301, %p302
      %p304 = pneg %p303
      // Predicated region
      $region29: #{conv_layer_forward.2} parent=27 // pred_check
        _
      $region30: #{conv_layer_forward.2} parent=27 // pred_check_branch
        %306 = sbr.rel (%p303) target = $region32
      $region31: #{conv_layer_forward.2} parent=27 // pred_region
        %vm307 = vcmask 7168
        %308 = vst.msk [vmem:[%s296] sm:$0xff] %vm307, 0.0
        %309 = vst.msk [vmem:[%s300] sm:$0xff] %vm307, 0.0
      $region32: #{conv_layer_forward.2} parent=27 // pred_fallthru
        _
      // Predicated region
      $region33: #{conv_layer_forward.2} parent=27 // pred_check
        %p310 = pneg %p302
      $region34: #{conv_layer_forward.2} parent=27 // pred_check_branch
        %312 = sbr.rel (%p310) target = $region36
      $region35: #{conv_layer_forward.2} parent=27 // pred_region
        %313 = vst [vmem:[#allocation2] sm:$0xff] 0.0
        %314 = vst [vmem:[#allocation2 + $0x8] sm:$0xff] 0.0
        %315 = vst [vmem:[#allocation2 + $0x10] sm:$0xff] 0.0
        %316 = vst [vmem:[#allocation2 + $0x18] sm:$0xff] 0.0
      $region36: #{conv_layer_forward.2} parent=27 // pred_fallthru
        _
      %v317 = vld [vmem:[#allocation2] sm:$0xff]
      %v318 = vld [vmem:[#allocation2 + $0x8] sm:$0xff]
      %v319 = vld [vmem:[#allocation2 + $0x10] sm:$0xff]
      %v320 = vld [vmem:[#allocation2 + $0x18] sm:$0xff]
      %v321 = vld [vmem:[%s282] sm:$0xff]
      %v322 = vld [vmem:[%s276] sm:$0xff]
      %v323 = vld [vmem:[%s276 + $0x8] sm:$0xff]
      %v324 = vld [vmem:[%s276 + $0x10] sm:$0xff]
      %v325 = vld [vmem:[%s276 + $0x18] sm:$0xff]
      %v326 = vld [vmem:[%s276 + $0x20] sm:$0xff]
      %v327 = vld [vmem:[%s276 + $0x28] sm:$0xff]
      %v328 = vld [vmem:[%s276 + $0x30] sm:$0xff]
      %v329 = vld [vmem:[%s276 + $0x38] sm:$0xff]
      %v330 = vld [vmem:[%s276 + $0x40] sm:$0xff]
      %v331 = vld [vmem:[%s276 + $0x48] sm:$0xff]
      %v332 = vld [vmem:[%s276 + $0x50] sm:$0xff]
      %v333 = vld [vmem:[%s276 + $0x58] sm:$0xff]
      %v334 = vld [vmem:[%s276 + $0x60] sm:$0xff]
      %v335 = vld [vmem:[%s276 + $0x68] sm:$0xff]
      %v336 = vld [vmem:[%s276 + $0x70] sm:$0xff]
      %v337 = vld [vmem:[%s276 + $0x78] sm:$0xff]
      %v338 = vld [vmem:[%s276 + $0x80] sm:$0xff]
      %v339 = vld [vmem:[%s276 + $0x88] sm:$0xff]
      %v340 = vld [vmem:[%s276 + $0x90] sm:$0xff]
      %v341 = vld [vmem:[%s276 + $0x98] sm:$0xff]
      %v342 = vld [vmem:[%s276 + $0xa0] sm:$0xff]
      %v343 = vld [vmem:[%s276 + $0xa8] sm:$0xff]
      %v344 = vld [vmem:[%s276 + $0xb0] sm:$0xff]
      %v345 = vld [vmem:[%s276 + $0xb8] sm:$0xff]
      %v346 = vld [vmem:[%s276 + $0xc0] sm:$0xff]
      %v347 = vld [vmem:[%s276 + $0xc8] sm:$0xff]
      %v348 = vld [vmem:[%s276 + $0xd0] sm:$0xff]
      %v349 = vld [vmem:[%s276 + $0xd8] sm:$0xff]
      %v350 = vld [vmem:[%s276 + $0xe0] sm:$0xff]
      %v351 = vld [vmem:[%s276 + $0xe8] sm:$0xff]
      %v352 = vld [vmem:[%s276 + $0xf0] sm:$0xff]
      %v353 = vld [vmem:[%s276 + $0xf8] sm:$0xff]
      %v354 = vld [vmem:[%s276 + $0x100] sm:$0xff]
      %v355 = vld [vmem:[%s276 + $0x108] sm:$0xff]
      %v356 = vld [vmem:[%s276 + $0x110] sm:$0xff]
      %v357 = vld [vmem:[%s276 + $0x118] sm:$0xff]
      %v358 = vld [vmem:[%s276 + $0x120] sm:$0xff]
      %v359 = vld [vmem:[%s276 + $0x128] sm:$0xff]
      %v360 = vld [vmem:[%s276 + $0x130] sm:$0xff]
      %v361 = vld [vmem:[%s276 + $0x138] sm:$0xff]
      %v362 = vld [vmem:[%s276 + $0x140] sm:$0xff]
      %v363 = vld [vmem:[%s276 + $0x148] sm:$0xff]
      %v364 = vld [vmem:[%s276 + $0x150] sm:$0xff]
      %v365 = vld [vmem:[%s276 + $0x158] sm:$0xff]
      %v366 = vld [vmem:[%s276 + $0x160] sm:$0xff]
      %v367 = vld [vmem:[%s276 + $0x168] sm:$0xff]
      %v368 = vld [vmem:[%s276 + $0x170] sm:$0xff]
      %v369 = vld [vmem:[%s276 + $0x178] sm:$0xff]
      %v370 = vld [vmem:[%s276 + $0x180] sm:$0xff]
      %v371 = vld [vmem:[%s276 + $0x188] sm:$0xff]
      %v372 = vld [vmem:[%s276 + $0x190] sm:$0xff]
      %v373 = vld [vmem:[%s276 + $0x198] sm:$0xff]
      %v374 = vld [vmem:[%s276 + $0x1a0] sm:$0xff]
      %v375 = vld [vmem:[%s276 + $0x1a8] sm:$0xff]
      %v376 = vld [vmem:[%s276 + $0x1b0] sm:$0xff]
      %v377 = vld [vmem:[%s276 + $0x1b8] sm:$0xff]
      %v378 = vld [vmem:[%s276 + $0x1c0] sm:$0xff]
      %v379 = vld [vmem:[%s276 + $0x1c8] sm:$0xff]
      %v380 = vld [vmem:[%s276 + $0x1d0] sm:$0xff]
      %v381 = vld [vmem:[%s276 + $0x1d8] sm:$0xff]
      %v382 = vld [vmem:[%s276 + $0x1e0] sm:$0xff]
      %v383 = vld [vmem:[%s276 + $0x1e8] sm:$0xff]
      %v384 = vld [vmem:[%s276 + $0x1f0] sm:$0xff]
      %v385 = vld [vmem:[%s276 + $0x1f8] sm:$0xff]
      %386 = vmatprep.subr.mxu0 %v323
      %387 = vmatpush1.msra.mxu0 %v322
      %388 = vmatprep.subr.mxu0 %v327
      %389 = vmatpush1.msra.mxu0 %v326
      %390 = vmatprep.subr.mxu0 %v331
      %391 = vmatpush1.msra.mxu0 %v330
      %392 = vmatprep.subr.mxu0 %v335
      %393 = vmatpush1.msra.mxu0 %v334
      %394 = vmatprep.subr.mxu0 %v339
      %395 = vmatpush1.msra.mxu0 %v338
      %396 = vmatprep.subr.mxu0 %v343
      %397 = vmatpush1.msra.mxu0 %v342
      %398 = vmatprep.subr.mxu0 %v347
      %399 = vmatpush1.msra.mxu0 %v346
      %400 = vmatprep.subr.mxu0 %v351
      %401 = vmatpush1.msra.mxu0 %v350
      %402 = vmatprep.subr.mxu0 %v355
      %403 = vmatpush1.msra.mxu0 %v354
      %404 = vmatprep.subr.mxu0 %v359
      %405 = vmatpush1.msra.mxu0 %v358
      %406 = vmatprep.subr.mxu0 %v363
      %407 = vmatpush1.msra.mxu0 %v362
      %408 = vmatprep.subr.mxu0 %v367
      %409 = vmatpush1.msra.mxu0 %v366
      %410 = vmatprep.subr.mxu0 %v371
      %411 = vmatpush1.msra.mxu0 %v370
      %412 = vmatprep.subr.mxu0 %v375
      %413 = vmatpush1.msra.mxu0 %v374
      %414 = vmatprep.subr.mxu0 %v379
      %415 = vmatpush1.msra.mxu0 %v378
      %416 = vmatprep.subr.mxu0 %v383
      %417 = vmatpush1.msra.mxu0 %v382
      %418 = vmatprep.subr.mxu0 0.0
      %419 = vmatpush1.msra.mxu0 0.0
      %420 = vmatprep.subr.mxu0 0.0
      %421 = vmatpush1.msra.mxu0 0.0
      %422 = vmatprep.subr.mxu0 0.0
      %423 = vmatpush1.msra.mxu0 0.0
      %424 = vmatprep.subr.mxu0 0.0
      %425 = vmatpush1.msra.mxu0 0.0
      %426 = vmatprep.subr.mxu0 0.0
      %427 = vmatpush1.msra.mxu0 0.0
      %428 = vmatprep.subr.mxu0 0.0
      %429 = vmatpush1.msra.mxu0 0.0
      %430 = vmatprep.subr.mxu0 0.0
      %431 = vmatpush1.msra.mxu0 0.0
      %432 = vmatprep.subr.mxu0 0.0
      %433 = vmatpush1.msra.mxu0 0.0
      %434 = vmatprep.subr.mxu0 0.0
      %435 = vmatpush1.msra.mxu0 0.0
      %436 = vmatprep.subr.mxu0 0.0
      %437 = vmatpush1.msra.mxu0 0.0
      %438 = vmatprep.subr.mxu0 0.0
      %439 = vmatpush1.msra.mxu0 0.0
      %440 = vmatprep.subr.mxu0 0.0
      %441 = vmatpush1.msra.mxu0 0.0
      %442 = vmatprep.subr.mxu0 0.0
      %443 = vmatpush1.msra.mxu0 0.0
      %444 = vmatprep.subr.mxu0 0.0
      %445 = vmatpush1.msra.mxu0 0.0
      %446 = vmatprep.subr.mxu0 0.0
      %447 = vmatpush1.msra.mxu0 0.0
      %448 = vmatprep.subr.mxu0 0.0
      %449 = vmatpush1.msra.mxu0 0.0
      %450 = vmatprep.mubr.f32.mxu0 0.0
      %451 = vmatmul.mubr.f32.gmra.mrb[0].mxu0 %v321
      %v452 = vpop.f32.mrb[0].mxu0
      %v453 = vadd.f32 0.0, %v452
      %v454 = vpop.f32.mrb[0].mxu0
      %v455 = vadd.f32 0.0, %v454
      %456 = vdwg.mxu0
      %457 = vmatprep.subr.mxu0 %v325
      %458 = vmatpush1.msra.mxu0 %v324
      %459 = vmatprep.subr.mxu0 %v329
      %460 = vmatpush1.msra.mxu0 %v328
      %461 = vmatprep.subr.mxu0 %v333
      %462 = vmatpush1.msra.mxu0 %v332
      %463 = vmatprep.subr.mxu0 %v337
      %464 = vmatpush1.msra.mxu0 %v336
      %465 = vmatprep.subr.mxu0 %v341
      %466 = vmatpush1.msra.mxu0 %v340
      %467 = vmatprep.subr.mxu0 %v345
      %468 = vmatpush1.msra.mxu0 %v344
      %469 = vmatprep.subr.mxu0 %v349
      %470 = vmatpush1.msra.mxu0 %v348
      %471 = vmatprep.subr.mxu0 %v353
      %472 = vmatpush1.msra.mxu0 %v352
      %473 = vmatprep.subr.mxu0 %v357
      %474 = vmatpush1.msra.mxu0 %v356
      %475 = vmatprep.subr.mxu0 %v361
      %476 = vmatpush1.msra.mxu0 %v360
      %477 = vmatprep.subr.mxu0 %v365
      %478 = vmatpush1.msra.mxu0 %v364
      %479 = vmatprep.subr.mxu0 %v369
      %480 = vmatpush1.msra.mxu0 %v368
      %481 = vmatprep.subr.mxu0 %v373
      %482 = vmatpush1.msra.mxu0 %v372
      %483 = vmatprep.subr.mxu0 %v377
      %484 = vmatpush1.msra.mxu0 %v376
      %485 = vmatprep.subr.mxu0 %v381
      %486 = vmatpush1.msra.mxu0 %v380
      %487 = vmatprep.subr.mxu0 %v385
      %488 = vmatpush1.msra.mxu0 %v384
      %489 = vmatprep.subr.mxu0 0.0
      %490 = vmatpush1.msra.mxu0 0.0
      %491 = vmatprep.subr.mxu0 0.0
      %492 = vmatpush1.msra.mxu0 0.0
      %493 = vmatprep.subr.mxu0 0.0
      %494 = vmatpush1.msra.mxu0 0.0
      %495 = vmatprep.subr.mxu0 0.0
      %496 = vmatpush1.msra.mxu0 0.0
      %497 = vmatprep.subr.mxu0 0.0
      %498 = vmatpush1.msra.mxu0 0.0
      %499 = vmatprep.subr.mxu0 0.0
      %500 = vmatpush1.msra.mxu0 0.0
      %501 = vmatprep.subr.mxu0 0.0
      %502 = vmatpush1.msra.mxu0 0.0
      %503 = vmatprep.subr.mxu0 0.0
      %504 = vmatpush1.msra.mxu0 0.0
      %505 = vmatprep.subr.mxu0 0.0
      %506 = vmatpush1.msra.mxu0 0.0
      %507 = vmatprep.subr.mxu0 0.0
      %508 = vmatpush1.msra.mxu0 0.0
      %509 = vmatprep.subr.mxu0 0.0
      %510 = vmatpush1.msra.mxu0 0.0
      %511 = vmatprep.subr.mxu0 0.0
      %512 = vmatpush1.msra.mxu0 0.0
      %513 = vmatprep.subr.mxu0 0.0
      %514 = vmatpush1.msra.mxu0 0.0
      %515 = vmatprep.subr.mxu0 0.0
      %516 = vmatpush1.msra.mxu0 0.0
      %517 = vmatprep.subr.mxu0 0.0
      %518 = vmatpush1.msra.mxu0 0.0
      %519 = vmatprep.subr.mxu0 0.0
      %520 = vmatpush1.msra.mxu0 0.0
      %521 = vmatprep.mubr.f32.mxu0 0.0
      %522 = vmatmul.mubr.f32.gmra.mrb[0].mxu0 %v321
      %v523 = vpop.f32.mrb[0].mxu0
      %v524 = vadd.f32 0.0, %v523
      %v525 = vpop.f32.mrb[0].mxu0
      %v526 = vadd.f32 0.0, %v525
      %527 = vdwg.mxu0
      %v528 = vadd.f32 %v317, %v453
      %v529 = vadd.f32 %v318, %v455
      %v530 = vadd.f32 %v319, %v524
      %v531 = vadd.f32 %v320, %v526
      %532 = vst [vmem:[#allocation2] sm:$0xff] %v528
      %533 = vst [vmem:[#allocation2 + $0x8] sm:$0xff] %v529
      %534 = vst [vmem:[#allocation2 + $0x10] sm:$0xff] %v530
      %535 = vst [vmem:[#allocation2 + $0x18] sm:$0xff] %v531
      // Predicated region
      $region37: #{conv_layer_forward.2} parent=27 // pred_check
        %p536 = pneg %p302
      $region38: #{conv_layer_forward.2} parent=27 // pred_check_branch
        %538 = sbr.rel (%p536) target = $region40
      $region39: #{conv_layer_forward.2} parent=27 // pred_region
        %v539 = vld [vmem:[#allocation2] sm:$0xff]
        %v540 = vld [vmem:[#allocation2 + $0x8] sm:$0xff]
        %v541 = vld [vmem:[#allocation2 + $0x10] sm:$0xff]
        %v542 = vld [vmem:[#allocation2 + $0x18] sm:$0xff]
        %543 = vst [vmem:[%s291] sm:$0xff] %v539
        %544 = vst [vmem:[%s291 + $0x8] sm:$0xff] %v540
        %545 = vst [vmem:[%s291 + $0x10] sm:$0xff] %v541
        %546 = vst [vmem:[%s291 + $0x18] sm:$0xff] %v542
        %v547 = vld [vmem:[%s296] sm:$0xff]
        %v548 = vadd.f32 %v539, %v540
        %v549 = vadd.f32 %v548, %v541
        %v550 = vadd.f32 %v549, %v542
        %551 = vadd.xlane.f32.xlu0 %v550
        %v552 = vpop.xlane.xlu0 %551
        %v553 = vadd.f32 %v547, %v552
        %vm554 = vcmask 7168
        %555 = vst.msk [vmem:[%s296] sm:$0xff] %vm554, %v553
        %v556 = vld [vmem:[%s300] sm:$0xff]
        %v557 = vmul.f32 %v539, %v539
        %v558 = vmul.f32 %v540, %v540
        %v559 = vmul.f32 %v541, %v541
        %v560 = vmul.f32 %v542, %v542
        %v561 = vadd.f32 %v557, %v558
        %v562 = vadd.f32 %v561, %v559
        %v563 = vadd.f32 %v562, %v560
        %564 = vadd.xlane.f32.xlu0 %v563
        %v565 = vpop.xlane.xlu0 %564
        %v566 = vadd.f32 %v556, %v565
        %567 = vst.msk [vmem:[%s300] sm:$0xff] %vm554, %v566
      $region40: #{conv_layer_forward.2} parent=27 // pred_fallthru
        _
      %s568 = smul.u32 4, %s22
      %p569 = scmp.lt.s32.totalorder %s21, 1
      %s570 = scalar_select %p569, %s21, 1
      %p571 = scmp.lt.s32.totalorder %s568, 3
      %s572 = scalar_select %p571, %s568, 3
      %s573 = smul.addr %s570, 4
      %s574 = sadd.s32 %s572, %s573
      %s575 = smul.addr %s574, 8
      %s576 = scalar_lea.vmem %s2, %s575
      %p577 = scmp.lt.s32.totalorder %s21, 1
      %s578 = scalar_select %p577, %s21, 1
      %s579 = smul.addr %s578, 8
      %s580 = scalar_lea.vmem %s3, %s579
      %p581 = scmp.lt.s32.totalorder %s21, 1
      %s582 = scalar_select %p581, %s21, 1
      %s583 = smul.addr %s582, 8
      %s584 = scalar_lea.vmem %s4, %s583
      // Predicated region
      $region41: #{conv_layer_forward.2} parent=27 // pred_check
        %p585 = pneg %p111
      $region42: #{conv_layer_forward.2} parent=27 // pred_check_branch
        %587 = sbr.rel (%p585) target = $region44
      $region43: #{conv_layer_forward.2} parent=27 // pred_region
        %s588 = smul.u32 4, %s22
      $region44: #{conv_layer_forward.2} parent=27 // pred_fallthru
        _
      // Predicated region
      $region45: #{conv_layer_forward.2} parent=27 // pred_check
        %p589 = pneg %p137
      $region46: #{conv_layer_forward.2} parent=27 // pred_check_branch
        %591 = sbr.rel (%p589) target = $region48
      $region47: #{conv_layer_forward.2} parent=27 // pred_region
        _
      $region48: #{conv_layer_forward.2} parent=27 // pred_fallthru
        _
      // Predicated region
      $region49: #{conv_layer_forward.2} parent=27 // pred_check
        %p592 = pneg %p163
      $region50: #{conv_layer_forward.2} parent=27 // pred_check_branch
        %594 = sbr.rel (%p592) target = $region52
      $region51: #{conv_layer_forward.2} parent=27 // pred_region
        _
      $region52: #{conv_layer_forward.2} parent=27 // pred_fallthru
        _
    $region28: #{conv_layer_forward.2} parent=5 // pred_fallthru
      _
    %p595 = scmp.le.s32.totalorder 2, %s11
    // Predicated region
    $region53: #{conv_layer_forward.2} parent=5 // pred_check
      %p596 = pneg %p595
    $region54: #{conv_layer_forward.2} parent=5 // pred_check_branch
      %598 = sbr.rel (%p596) target = $region56
    $region55: #{conv_layer_forward.2} parent=5 // pred_region
      %s599 = ssub.s32 %s11, 2
      // Predicated region
      $region57: #{conv_layer_forward.2} parent=55 // pred_check
        %p600 = pneg %p117
      $region58: #{conv_layer_forward.2} parent=55 // pred_check_branch
        %602 = sbr.rel (%p600) target = $region60
      $region59: #{conv_layer_forward.2} parent=55 // pred_region
        %s603 = smul.u32 4, %s25
        %p604 = scmp.lt.s32.totalorder %s24, 1
        %s605 = scalar_select %p604, %s24, 1
        %p606 = scmp.lt.s32.totalorder %s603, 3
        %s607 = scalar_select %p606, %s603, 3
        %s608 = smul.addr %s605, 4
        %s609 = sadd.s32 %s607, %s608
        %s610 = smul.addr %s609, 8
        %s611 = scalar_lea.vmem %s2, %s610
      $region60: #{conv_layer_forward.2} parent=55 // pred_fallthru
        _
      // Predicated region
      $region61: #{conv_layer_forward.2} parent=55 // pred_check
        %p612 = pneg %p143
      $region62: #{conv_layer_forward.2} parent=55 // pred_check_branch
        %614 = sbr.rel (%p612) target = $region64
      $region63: #{conv_layer_forward.2} parent=55 // pred_region
        %p615 = scmp.lt.s32.totalorder %s24, 1
        %s616 = scalar_select %p615, %s24, 1
        %s617 = smul.addr %s616, 8
        %s618 = scalar_lea.vmem %s3, %s617
      $region64: #{conv_layer_forward.2} parent=55 // pred_fallthru
        _
      // Predicated region
      $region65: #{conv_layer_forward.2} parent=55 // pred_check
        %p619 = pneg %p169
      $region66: #{conv_layer_forward.2} parent=55 // pred_check_branch
        %621 = sbr.rel (%p619) target = $region68
      $region67: #{conv_layer_forward.2} parent=55 // pred_region
        %p622 = scmp.lt.s32.totalorder %s24, 1
        %s623 = scalar_select %p622, %s24, 1
        %s624 = smul.addr %s623, 8
        %s625 = scalar_lea.vmem %s4, %s624
      $region68: #{conv_layer_forward.2} parent=55 // pred_fallthru
        _
    $region56: #{conv_layer_forward.2} parent=5 // pred_fallthru
      _
  $region6: #{conv_layer_forward.2} parent=0 // loop_footer
    %s15 = sadd.s32 1, %s11
  $region7: #{conv_layer_forward.2} parent=0 // loop_footer_branch
    %10 = sbr.rel target = $region3
  $region8: #{conv_layer_forward.2} parent=0 // loop_exit
    _

</llo_original>
